<compile_context>
chip_gen: v7x
topology: tpu7x:2x2x1
jax: 0.10.0
libtpu: 0.0.40
codegen_flags: <defaults>
</compile_context>

<pallas_src>
import functools

import jax
import jax.numpy as jnp
from jax.experimental import pallas as pl
from jax.experimental.pallas import tpu as pltpu


def _leaky_relu(z, slope):
    return jnp.where(z >= 0, z, slope * z)


def sequential_ffn_kernel(x_ref, w_ref, b_ref, o_ref, *, n_dense, slope, out_nl):
    # x_ref: (tile_rows, Dp) packed activations (f32 or bf16)
    # w_ref: (n_dense, Dp, Dp) block-diagonal packed weights (f32, VMEM-resident)
    # b_ref: (n_dense, 1, Dp)  packed biases               (f32, VMEM-resident)
    h = x_ref[...]                                # feed I/O dtype straight to the MXU
    for i in range(n_dense):                      # n_dense is static -> unrolled
        z = jnp.dot(h, w_ref[i], preferred_element_type=jnp.float32)
        z = z + b_ref[i]                          # (1, Dp) broadcast over rows
        if i < n_dense - 1:
            z = _leaky_relu(z, slope)
        else:
            if out_nl == "relu":                  # module uses leaky_relu(slope) here too
                z = _leaky_relu(z, slope)
            elif out_nl == "tanh":
                z = jnp.tanh(z)
            # 'none' -> identity
        # TODO(synk): per-layer training-mode dropout omitted (eval = identity)
        h = z
    o_ref[...] = h.astype(o_ref.dtype)


def pack_ffn_params(weights, biases, d_model):
    """Pre-pack parameters ONCE (hoisted out of the per-call path).

    weights: list of N (d_model, d_model) arrays in nn.Linear layout (y = x @ W.T + b)
    biases : list of N (d_model,) arrays.
    Returns (w_stack (N, Dp, Dp), b_stack (N, 1, Dp), pack, Dp).
      * If d_model divides 128: pack = 128 // d_model, Dp = 128, and each packed
        weight is block-diagonal with `pack` copies of W.T so `pack` consecutive
        activation rows are processed as one 128-lane packed row.
      * Otherwise: pack = 1 and Dp = round_up(d_model, 128); W.T / bias are
        zero-padded so output stores stay full-lane (no masked vst.msk).
    """
    n = len(weights)
    if d_model <= 128 and 128 % d_model == 0:
        pack = 128 // d_model
        Dp = 128
        eye = jnp.eye(pack, dtype=jnp.float32)
        w_stack = jnp.stack(
            [jnp.kron(eye, jnp.asarray(w, jnp.float32).T) for w in weights])
        b_stack = jnp.stack(
            [jnp.tile(jnp.asarray(b, jnp.float32), pack).reshape(1, Dp)
             for b in biases])
    else:
        pack = 1
        Dp = -(-d_model // 128) * 128
        pad = Dp - d_model
        w_stack = jnp.stack(
            [jnp.pad(jnp.asarray(w, jnp.float32).T, ((0, pad), (0, pad)))
             for w in weights])
        b_stack = jnp.stack(
            [jnp.pad(jnp.asarray(b, jnp.float32), (0, pad)).reshape(1, Dp)
             for b in biases])
    assert w_stack.shape == (n, Dp, Dp) and b_stack.shape == (n, 1, Dp)
    return w_stack, b_stack, pack, Dp


def sequential_ffn(x, w_stack, b_stack, pack, *, leaky_relu_slope=0.0,
                   dense_output_nonlinearity="relu", tile_rows=None):
    """Pallas implementation of Sequential_FFN.forward (eval mode).

    x: (..., d_model), float32 or bfloat16 (bf16 halves HBM traffic; accumulation
       stays f32).  w_stack / b_stack / pack come from pack_ffn_params.
    """
    orig_shape = x.shape
    d_model = int(orig_shape[-1])
    n_dense = int(w_stack.shape[0])
    if n_dense == 0:
        return x
    Dp = int(w_stack.shape[-1])
    lanes = pack * d_model
    assert lanes <= Dp, "packed weight does not match d_model/pack"

    M = 1
    for s in orig_shape[:-1]:
        M *= int(s)
    x2 = x.reshape(M, d_model)

    # ---- packed-row view.  Fast path: no pad / no slice when M % pack == 0. ----
    M_pad = M if M % pack == 0 else M + (pack - M % pack)   # <= pack-1 extra rows
    rows = M_pad // pack
    if M_pad != M:
        x2 = jnp.pad(x2, ((0, M_pad - M), (0, 0)))
    xp = x2.reshape(rows, lanes)                             # lane-dense view (free)
    if lanes != Dp:                                          # pack==1 fallback only
        xp = jnp.pad(xp, ((0, 0), (0, Dp - lanes)))

    # ---- row tiling: bounded tile, ragged last block handled by the grid. ----
    itemsize = jnp.dtype(x.dtype).itemsize
    sub = 16 if itemsize == 2 else 8                         # sublane granularity
    if tile_rows is None:
        tile_rows = 4096          # big tiles amortize ~0.35us/step (v7x: 3.2 TB/s HBM)
    tile_rows = int(tile_rows)
    if rows <= sub:
        tile_rows = rows          # block == full array: legal for any small size
    else:
        # keep ~8 grid steps so megacore (v7x: 2 TCs) sharding + pipelining have work
        per_step = -(-rows // 8)
        per_step = -(-per_step // sub) * sub
        tile_rows = max(sub, min((tile_rows // sub) * sub, per_step))
    grid_steps = pl.cdiv(rows, tile_rows)

    # ---- VMEM budget: x (<=3 bufs) + out (2 bufs) + params (2 bufs) + headroom
    # for the unrolled per-layer f32 intermediates.  Keep above v5e's 16 MiB
    # scoped default (we may raise tile size) and well below v7x physical 64 MiB.
    io_bytes = tile_rows * Dp * itemsize
    param_bytes = n_dense * (Dp * Dp + Dp) * 4
    need = 5 * io_bytes + 2 * param_bytes + (n_dense + 2) * tile_rows * Dp * 4
    vmem_limit = int(min(48 << 20, max(32 << 20, 2 * need)))

    cost = pl.CostEstimate(
        flops=int(2 * n_dense * rows * Dp * Dp),
        transcendentals=int(rows * Dp) if dense_output_nonlinearity == "tanh" else 0,
        bytes_accessed=int(2 * rows * Dp * itemsize + param_bytes),
    )

    kernel = functools.partial(
        sequential_ffn_kernel,
        n_dense=n_dense,
        slope=leaky_relu_slope,
        out_nl=dense_output_nonlinearity,
    )

    def build(buffer_x):
        x_kwargs = {}
        if buffer_x:
            # DMA-bound kernel with trivial compute: a 3rd activation buffer hides
            # DMA latency/jitter; weights/bias never change block so default is fine.
            x_kwargs["pipeline_mode"] = pl.Buffered(3)
        return pl.pallas_call(
            kernel,
            out_shape=jax.ShapeDtypeStruct((rows, Dp), x.dtype),
            grid_spec=pltpu.PrefetchScalarGridSpec(
                num_scalar_prefetch=0,
                grid=(grid_steps,),
                in_specs=[
                    pl.BlockSpec((tile_rows, Dp), lambda i: (i, 0), **x_kwargs),
                    pl.BlockSpec((n_dense, Dp, Dp), lambda i: (0, 0, 0)),  # resident
                    pl.BlockSpec((n_dense, 1, Dp), lambda i: (0, 0, 0)),   # resident
                ],
                out_specs=pl.BlockSpec((tile_rows, Dp), lambda i: (i, 0)),
            ),
            compiler_params=pltpu.CompilerParams(
                dimension_semantics=("parallel",),
                vmem_limit_bytes=vmem_limit,
            ),
            cost_estimate=cost,
        )

    if grid_steps >= 4 and hasattr(pl, "Buffered"):
        try:
            out = build(True)(xp, w_stack, b_stack)
        except Exception:
            # Older jax without BlockSpec pipeline_mode support: default 2-deep pipeline.
            out = build(False)(xp, w_stack, b_stack)
    else:
        out = build(False)(xp, w_stack, b_stack)

    if lanes != Dp:
        out = out[:, :lanes]
    out = out.reshape(M_pad, d_model)
    if M_pad != M:
        out = out[:M]
    return out.reshape(orig_shape)


# ----------------------------- self-test -------------------------------------

def _ffn_reference(x, weights, biases, slope, out_nl):
    hi = jax.lax.Precision.HIGHEST
    h = x
    for i in range(len(weights) - 1):
        h = _leaky_relu(
            jnp.einsum("...d,ed->...e", h, weights[i], precision=hi) + biases[i], slope)
    z = jnp.einsum("...d,ed->...e", h, weights[-1], precision=hi) + biases[-1]
    if out_nl == "relu":
        z = _leaky_relu(z, slope)
    elif out_nl == "tanh":
        z = jnp.tanh(z)
    return z


def _make_params(key, d_model, n_dense):
    bound = 1.0 / (d_model ** 0.5)
    keys = jax.random.split(key, 2 * n_dense)
    weights, biases = [], []
    for i in range(n_dense):
        weights.append(jax.random.uniform(keys[2 * i], (d_model, d_model),
                                          dtype=jnp.float32, minval=-bound, maxval=bound))
        biases.append(jax.random.uniform(keys[2 * i + 1], (d_model,),
                                         dtype=jnp.float32, minval=-bound, maxval=bound))
    return weights, biases


if __name__ == "__main__":
    key = jax.random.PRNGKey(0)
    k1, k2, k3 = jax.random.split(key, 3)
    slope = 0.1

    # --- Test 1: module-default small shapes (batch=2, seq=8, d_model=32,
    #             N_dense=2, 'relu' output nonlinearity), f32 I/O. ---
    d_model, n_dense, out_nl = 32, 2, "relu"
    x = jax.random.normal(k1, (2, 8, d_model), dtype=jnp.float32)
    weights, biases = _make_params(k2, d_model, n_dense)
    w_stack, b_stack, pack, _ = pack_ffn_params(weights, biases, d_model)

    y = jax.block_until_ready(
        sequential_ffn(x, w_stack, b_stack, pack, leaky_relu_slope=slope,
                       dense_output_nonlinearity=out_nl))
    y_ref = _ffn_reference(x, weights, biases, slope, out_nl)
    assert y.shape == x.shape
    assert jnp.allclose(y, y_ref, atol=1e-5, rtol=1e-5), "f32 test 1 mismatch"

    # --- Test 2: ragged row count (M % pack != 0, ragged last grid tile,
    #             multi-step grid), 'tanh' output, N_dense=3. ---
    d2, n2, out2 = 32, 3, "tanh"
    x2 = jax.random.normal(k3, (3, 33, d2), dtype=jnp.float32)
    weights2, biases2 = _make_params(k2, d2, n2)
    w2, b2, pack2, _ = pack_ffn_params(weights2, biases2, d2)
    y2 = jax.block_until_ready(
        sequential_ffn(x2, w2, b2, pack2, leaky_relu_slope=slope,
                       dense_output_nonlinearity=out2))
    y2_ref = _ffn_reference(x2, weights2, biases2, slope, out2)
    assert jnp.allclose(y2, y2_ref, atol=1e-4, rtol=1e-4), "f32 test 2 mismatch"

    # --- Test 3: bf16 I/O path (halves HBM traffic; accumulation stays f32). ---
    y_bf16 = jax.block_until_ready(
        sequential_ffn(x.astype(jnp.bfloat16), w_stack, b_stack, pack,
                       leaky_relu_slope=slope, dense_output_nonlinearity=out_nl))
    assert y_bf16.dtype == jnp.bfloat16
    assert jnp.allclose(y_bf16.astype(jnp.float32), y_ref, atol=5e-2, rtol=5e-2), \
        "bf16 test mismatch"

    print("KERNEL_OK")
</pallas_src>

<mosaic_0001>
module attributes {stable_mosaic.version = 11 : i64} {
  func.func @sequential_ffn_kernel(%arg0: i32, %arg1: memref<4x128xf32, #tpu.memory_space<vmem>>, %arg2: memref<2x128x128xf32, #tpu.memory_space<vmem>>, %arg3: memref<2x1x128xf32, #tpu.memory_space<vmem>>, %arg4: memref<4x128xf32, #tpu.memory_space<vmem>>) attributes {dimension_semantics = [#tpu.dimension_semantics<parallel>], iteration_bounds = array<i64: 1>, scalar_prefetch = 0 : i64, scratch_operands = 0 : i64, tpu.core_type = #tpu.core_type<tc>, window_params = [{transform_indices = @transform_0, window_bounds = array<i64: 4, 128>}, {pipeline_mode = #tpu.pipeline_mode<synchronous>, transform_indices = @transform_1, window_bounds = array<i64: 2, 128, 128>}, {pipeline_mode = #tpu.pipeline_mode<synchronous>, transform_indices = @transform_2, window_bounds = array<i64: 2, 1, 128>}, {transform_indices = @transform_3, window_bounds = array<i64: 4, 128>}]} {
    %c0 = arith.constant 0 : index
    %c0_0 = arith.constant 0 : index
    %0 = vector.load %arg1[%c0, %c0_0] : memref<4x128xf32, #tpu.memory_space<vmem>>, vector<4x128xf32>
    %c0_1 = arith.constant 0 : index
    %c0_2 = arith.constant 0 : index
    %c0_3 = arith.constant 0 : index
    %1 = vector.load %arg2[%c0_1, %c0_2, %c0_3] : memref<2x128x128xf32, #tpu.memory_space<vmem>>, vector<1x128x128xf32>
    %2 = vector.shape_cast %1 : vector<1x128x128xf32> to vector<128x128xf32>
    %cst = arith.constant dense<0.000000e+00> : vector<4x128xf32>
    %3 = tpu.matmul %0, %2, %cst {dimension_numbers = #tpu.dot_dimension_numbers<[1], [0], [0], [1], [0, 0, 1, 1], [], []>} : vector<4x128xf32>, vector<128x128xf32>, vector<4x128xf32> -> vector<4x128xf32>
    %c0_4 = arith.constant 0 : index
    %c0_5 = arith.constant 0 : index
    %c0_6 = arith.constant 0 : index
    %4 = vector.load %arg3[%c0_4, %c0_5, %c0_6] : memref<2x1x128xf32, #tpu.memory_space<vmem>>, vector<1x1x128xf32>
    %5 = vector.shape_cast %4 : vector<1x1x128xf32> to vector<1x128xf32>
    %6 = vector.broadcast %5 : vector<1x128xf32> to vector<4x128xf32>
    %7 = arith.addf %3, %6 : vector<4x128xf32>
    %cst_7 = arith.constant 0.000000e+00 : f32
    %8 = vector.broadcast %cst_7 : f32 to vector<4x128xf32>
    %9 = arith.cmpf oge, %7, %8 : vector<4x128xf32>
    %cst_8 = arith.constant 1.000000e-01 : f32
    %10 = vector.broadcast %cst_8 : f32 to vector<4x128xf32>
    %11 = arith.mulf %10, %7 : vector<4x128xf32>
    %12 = arith.select %9, %7, %11 : vector<4x128xi1>, vector<4x128xf32>
    %c1 = arith.constant 1 : index
    %c0_9 = arith.constant 0 : index
    %c0_10 = arith.constant 0 : index
    %13 = vector.load %arg2[%c1, %c0_9, %c0_10] : memref<2x128x128xf32, #tpu.memory_space<vmem>>, vector<1x128x128xf32>
    %14 = vector.shape_cast %13 : vector<1x128x128xf32> to vector<128x128xf32>
    %cst_11 = arith.constant dense<0.000000e+00> : vector<4x128xf32>
    %15 = tpu.matmul %12, %14, %cst_11 {dimension_numbers = #tpu.dot_dimension_numbers<[1], [0], [0], [1], [0, 0, 1, 1], [], []>} : vector<4x128xf32>, vector<128x128xf32>, vector<4x128xf32> -> vector<4x128xf32>
    %c1_12 = arith.constant 1 : index
    %c0_13 = arith.constant 0 : index
    %c0_14 = arith.constant 0 : index
    %16 = vector.load %arg3[%c1_12, %c0_13, %c0_14] : memref<2x1x128xf32, #tpu.memory_space<vmem>>, vector<1x1x128xf32>
    %17 = vector.shape_cast %16 : vector<1x1x128xf32> to vector<1x128xf32>
    %18 = vector.broadcast %17 : vector<1x128xf32> to vector<4x128xf32>
    %19 = arith.addf %15, %18 : vector<4x128xf32>
    %cst_15 = arith.constant 0.000000e+00 : f32
    %20 = vector.broadcast %cst_15 : f32 to vector<4x128xf32>
    %21 = arith.cmpf oge, %19, %20 : vector<4x128xf32>
    %cst_16 = arith.constant 1.000000e-01 : f32
    %22 = vector.broadcast %cst_16 : f32 to vector<4x128xf32>
    %23 = arith.mulf %22, %19 : vector<4x128xf32>
    %24 = arith.select %21, %19, %23 : vector<4x128xi1>, vector<4x128xf32>
    %c0_17 = arith.constant 0 : index
    %c0_18 = arith.constant 0 : index
    %25 = vector.load %arg4[%c0_17, %c0_18] : memref<4x128xf32, #tpu.memory_space<vmem>>, vector<4x128xf32>
    tpu.vector_store %arg4[%c0_17, %c0_18], %24 {strides = array<i32>} : memref<4x128xf32, #tpu.memory_space<vmem>>, vector<4x128xf32>,
    return
  }
  func.func @transform_0(%arg0: i32) -> (i32, i32) {
    %c0_i32 = arith.constant 0 : i32
    %c0_i32_0 = arith.constant 0 : i32
    return %arg0, %c0_i32 : i32, i32
  }
  func.func @transform_1(%arg0: i32) -> (i32, i32, i32) {
    %c0_i32 = arith.constant 0 : i32
    %c0_i32_0 = arith.constant 0 : i32
    %c0_i32_1 = arith.constant 0 : i32
    %c0_i32_2 = arith.constant 0 : i32
    return %c0_i32, %c0_i32_0, %c0_i32_1 : i32, i32, i32
  }
  func.func @transform_2(%arg0: i32) -> (i32, i32, i32) {
    %c0_i32 = arith.constant 0 : i32
    %c0_i32_0 = arith.constant 0 : i32
    %c0_i32_1 = arith.constant 0 : i32
    %c0_i32_2 = arith.constant 0 : i32
    return %c0_i32, %c0_i32_0, %c0_i32_1 : i32, i32, i32
  }
  func.func @transform_3(%arg0: i32) -> (i32, i32) {
    %c0_i32 = arith.constant 0 : i32
    %c0_i32_0 = arith.constant 0 : i32
    return %arg0, %c0_i32 : i32, i32
  }
}

</mosaic_0001>

<llo_original>
// kernel: tpu_custom_call.1
$region0: #{tpu_custom_call.1}
  #allocation0 [shape = 'u32[]', space=smem, size = 0x4, offset = 0x4, fixed_abs, tag = 'smem constant byte address 0x4 - core index']
  #allocation1 [shape = 'u32[144,128]{1,0:T(1,128)}', space=vmem, size = 0x12000, scoped, tag = 'internal scratch']
  %s0 = inlined_call_operand.hbm [shape: f32[4,128], index: 0, kind: input, shape index: {}]
  %s1 = inlined_call_operand.hbm [shape: f32[2,128,128], index: 1, kind: input, shape index: {}]
  %s2 = inlined_call_operand.vmem [shape: f32[2,1,128], index: 2, kind: input, shape index: {}]
  %s3 = inlined_call_operand.hbm [shape: f32[4,128], index: 3, kind: output, shape index: {}]
  %s4 = sld [smem:[#allocation0]]
  $region30: #{tpu_custom_call.1} parent=0
    _
  %s6 = ssub.s32 1, %s4
  %s7 = scalar_select 0, %s6, %s4
  $region1: #{tpu_custom_call.1} parent=0
    #allocation2 [shape = 'u8[2048]{0}', space=vmem, size = 0x800, scoped, tag = 'input window, operand 0, single buffered']
    #allocation3 [shape = 's32[1]{0}', space=sflag, size = 0x4, scoped, tag = 'scoped memory for tpu_custom_call.1']
    #allocation4 [shape = 's32[1]{0}', space=sflag, size = 0x4, scoped, tag = 'scoped memory for tpu_custom_call.1']
    #allocation5 [shape = 'u8[131072]{0}', space=vmem, size = 0x20000, scoped, tag = 'input window, operand 1, single buffered']
    #allocation6 [shape = 's32[1]{0}', space=sflag, size = 0x4, scoped, tag = 'scoped memory for tpu_custom_call.1']
    #allocation7 [shape = 'u8[2048]{0}', space=vmem, size = 0x800, scoped, tag = 'output window, operand 0, single buffered']
    %8 = vsyncpa [#allocation3], 0
    %9 = vsyncpa [#allocation6], 0
    %10 = vsyncpa [#allocation4], 0
    // Predicated region
    $region2: #{tpu_custom_call.1} parent=1 // pred_check
      _
    $region3: #{tpu_custom_call.1} parent=1 // pred_check_branch
      %12 = sbr.rel (0) target = $region5
    $region4: #{tpu_custom_call.1} parent=1 // pred_region
      %s14 = ssub.s32 64, 64
      %15 = vsyncadd [#allocation3], %s14
      %s17 = sshll.u32 [#allocation2], 4
      %s18 = int_to_ptr.vmem [resolvable:$true] %s17
      %20 = dma.hbm_to_vmem [thread:$0]  %s0, 64, %s18, [#allocation3]
    $region5: #{tpu_custom_call.1} parent=1 // pred_fallthru
      _
    // Predicated region
    $region6: #{tpu_custom_call.1} parent=1 // pred_check
      _
    $region7: #{tpu_custom_call.1} parent=1 // pred_check_branch
      %22 = sbr.rel (0) target = $region9
    $region8: #{tpu_custom_call.1} parent=1 // pred_region
      %s24 = ssub.s32 4096, 4096
      %25 = vsyncadd [#allocation6], %s24
      %s26 = sshll.u32 [#allocation5], 4
      %s27 = int_to_ptr.vmem [resolvable:$true] %s26
      %32 = dma.hbm_to_vmem [thread:$0]  %s1, 4096, %s27, [#allocation6], 128, 128, 8
    $region9: #{tpu_custom_call.1} parent=1 // pred_fallthru
      _
    // Predicated region
    $region10: #{tpu_custom_call.1} parent=1 // pred_check
      _
    $region11: #{tpu_custom_call.1} parent=1 // pred_check_branch
      %34 = sbr.rel (0) target = $region13
    $region12: #{tpu_custom_call.1} parent=1 // pred_region
      _
    $region13: #{tpu_custom_call.1} parent=1 // pred_fallthru
      _
    // Predicated region
    $region14: #{tpu_custom_call.1} parent=1 // pred_check
      _
    $region15: #{tpu_custom_call.1} parent=1 // pred_check_branch
      %36 = sbr.rel (0) target = $region17
    $region16: #{tpu_custom_call.1} parent=1 // pred_region
      %37 = dma.done [#allocation3], 64
    $region17: #{tpu_custom_call.1} parent=1 // pred_fallthru
      _
    // Predicated region
    $region18: #{tpu_custom_call.1} parent=1 // pred_check
      _
    $region19: #{tpu_custom_call.1} parent=1 // pred_check_branch
      %39 = sbr.rel (0) target = $region21
    $region20: #{tpu_custom_call.1} parent=1 // pred_region
      %40 = dma.done [#allocation6], 4096
    $region21: #{tpu_custom_call.1} parent=1 // pred_fallthru
      _
    %v41 = vld [vmem:[#allocation2] sm:$0xf]
    %v42 = vld [vmem:[#allocation5] sm:$0xff]
    %v43 = vld [vmem:[#allocation5 + $0x8] sm:$0xff]
    %v44 = vld [vmem:[#allocation5 + $0x10] sm:$0xff]
    %v45 = vld [vmem:[#allocation5 + $0x18] sm:$0xff]
    %v46 = vld [vmem:[#allocation5 + $0x20] sm:$0xff]
    %v47 = vld [vmem:[#allocation5 + $0x28] sm:$0xff]
    %v48 = vld [vmem:[#allocation5 + $0x30] sm:$0xff]
    %v49 = vld [vmem:[#allocation5 + $0x38] sm:$0xff]
    %v50 = vld [vmem:[#allocation5 + $0x40] sm:$0xff]
    %v51 = vld [vmem:[#allocation5 + $0x48] sm:$0xff]
    %v52 = vld [vmem:[#allocation5 + $0x50] sm:$0xff]
    %v53 = vld [vmem:[#allocation5 + $0x58] sm:$0xff]
    %v54 = vld [vmem:[#allocation5 + $0x60] sm:$0xff]
    %v55 = vld [vmem:[#allocation5 + $0x68] sm:$0xff]
    %v56 = vld [vmem:[#allocation5 + $0x70] sm:$0xff]
    %v57 = vld [vmem:[#allocation5 + $0x78] sm:$0xff]
    %v58 = vld [vmem:[%s2] sm:$0x1]
    %v60 = vlaneseq
    %v61 = vshrl.u32 %v60, 7
    %v62 = vsub.s32 0, %v61
    %v63 = vrot.slane %v58, %v62
    %65 = vmatprep.subr.mxu0 0.0
    %66 = vmatpush1.msra.mxu0 %v42
    %67 = vmatprep.subr.mxu0 0.0
    %68 = vmatpush1.msra.mxu0 %v43
    %69 = vmatprep.subr.mxu0 0.0
    %70 = vmatpush1.msra.mxu0 %v44
    %71 = vmatprep.subr.mxu0 0.0
    %72 = vmatpush1.msra.mxu0 %v45
    %73 = vmatprep.subr.mxu0 0.0
    %74 = vmatpush1.msra.mxu0 %v46
    %75 = vmatprep.subr.mxu0 0.0
    %76 = vmatpush1.msra.mxu0 %v47
    %77 = vmatprep.subr.mxu0 0.0
    %78 = vmatpush1.msra.mxu0 %v48
    %79 = vmatprep.subr.mxu0 0.0
    %80 = vmatpush1.msra.mxu0 %v49
    %81 = vmatprep.subr.mxu0 0.0
    %82 = vmatpush1.msra.mxu0 %v50
    %83 = vmatprep.subr.mxu0 0.0
    %84 = vmatpush1.msra.mxu0 %v51
    %85 = vmatprep.subr.mxu0 0.0
    %86 = vmatpush1.msra.mxu0 %v52
    %87 = vmatprep.subr.mxu0 0.0
    %88 = vmatpush1.msra.mxu0 %v53
    %89 = vmatprep.subr.mxu0 0.0
    %90 = vmatpush1.msra.mxu0 %v54
    %91 = vmatprep.subr.mxu0 0.0
    %92 = vmatpush1.msra.mxu0 %v55
    %93 = vmatprep.subr.mxu0 0.0
    %94 = vmatpush1.msra.mxu0 %v56
    %95 = vmatprep.subr.mxu0 0.0
    %96 = vmatpush1.msra.mxu0 %v57
    %97 = vmatprep.subr.mxu0 0.0
    %98 = vmatpush1.msra.mxu0 0.0
    %99 = vmatprep.subr.mxu0 0.0
    %100 = vmatpush1.msra.mxu0 0.0
    %101 = vmatprep.subr.mxu0 0.0
    %102 = vmatpush1.msra.mxu0 0.0
    %103 = vmatprep.subr.mxu0 0.0
    %104 = vmatpush1.msra.mxu0 0.0
    %105 = vmatprep.subr.mxu0 0.0
    %106 = vmatpush1.msra.mxu0 0.0
    %107 = vmatprep.subr.mxu0 0.0
    %108 = vmatpush1.msra.mxu0 0.0
    %109 = vmatprep.subr.mxu0 0.0
    %110 = vmatpush1.msra.mxu0 0.0
    %111 = vmatprep.subr.mxu0 0.0
    %112 = vmatpush1.msra.mxu0 0.0
    %113 = vmatprep.subr.mxu0 0.0
    %114 = vmatpush1.msra.mxu0 0.0
    %115 = vmatprep.subr.mxu0 0.0
    %116 = vmatpush1.msra.mxu0 0.0
    %117 = vmatprep.subr.mxu0 0.0
    %118 = vmatpush1.msra.mxu0 0.0
    %119 = vmatprep.subr.mxu0 0.0
    %120 = vmatpush1.msra.mxu0 0.0
    %121 = vmatprep.subr.mxu0 0.0
    %122 = vmatpush1.msra.mxu0 0.0
    %123 = vmatprep.subr.mxu0 0.0
    %124 = vmatpush1.msra.mxu0 0.0
    %125 = vmatprep.subr.mxu0 0.0
    %126 = vmatpush1.msra.mxu0 0.0
    %127 = vmatprep.subr.mxu0 0.0
    %128 = vmatpush1.msra.mxu0 0.0
    %129 = vmatprep.mubr.f32.mxu0 0.0
    %130 = vmatmul.mubr.f32.gmra.mrb[0].mxu0 %v41
    %v131 = vpop.f32.mrb[0].mxu0
    %v132 = vadd.f32 %v63, %v131
    %v133 = vpop.f32.mrb[0].mxu0
    %134 = vdwg.mxu0
    %vm135 = vcmp.ge.f32.partialorder %v132, 0.0
    %v136 = vmul.f32 %v132, 0.1
    %v137 = vsel %vm135, %v132, %v136
    %s138 = scalar_lea.vmem [#allocation5], 128
    %v139 = vld [vmem:[%s138] sm:$0xff]
    %v140 = vld [vmem:[%s138 + $0x8] sm:$0xff]
    %v141 = vld [vmem:[%s138 + $0x10] sm:$0xff]
    %v142 = vld [vmem:[%s138 + $0x18] sm:$0xff]
    %v143 = vld [vmem:[%s138 + $0x20] sm:$0xff]
    %v144 = vld [vmem:[%s138 + $0x28] sm:$0xff]
    %v145 = vld [vmem:[%s138 + $0x30] sm:$0xff]
    %v146 = vld [vmem:[%s138 + $0x38] sm:$0xff]
    %v147 = vld [vmem:[%s138 + $0x40] sm:$0xff]
    %v148 = vld [vmem:[%s138 + $0x48] sm:$0xff]
    %v149 = vld [vmem:[%s138 + $0x50] sm:$0xff]
    %v150 = vld [vmem:[%s138 + $0x58] sm:$0xff]
    %v151 = vld [vmem:[%s138 + $0x60] sm:$0xff]
    %v152 = vld [vmem:[%s138 + $0x68] sm:$0xff]
    %v153 = vld [vmem:[%s138 + $0x70] sm:$0xff]
    %v154 = vld [vmem:[%s138 + $0x78] sm:$0xff]
    %s155 = scalar_lea.vmem %s2, 1
    %v156 = vld [vmem:[%s155] sm:$0x1]
    %v158 = vlaneseq
    %v159 = vshrl.u32 %v158, 7
    %v160 = vsub.s32 0, %v159
    %v161 = vrot.slane %v156, %v160
    %163 = vmatprep.subr.mxu0 0.0
    %164 = vmatpush1.msra.mxu0 %v139
    %165 = vmatprep.subr.mxu0 0.0
    %166 = vmatpush1.msra.mxu0 %v140
    %167 = vmatprep.subr.mxu0 0.0
    %168 = vmatpush1.msra.mxu0 %v141
    %169 = vmatprep.subr.mxu0 0.0
    %170 = vmatpush1.msra.mxu0 %v142
    %171 = vmatprep.subr.mxu0 0.0
    %172 = vmatpush1.msra.mxu0 %v143
    %173 = vmatprep.subr.mxu0 0.0
    %174 = vmatpush1.msra.mxu0 %v144
    %175 = vmatprep.subr.mxu0 0.0
    %176 = vmatpush1.msra.mxu0 %v145
    %177 = vmatprep.subr.mxu0 0.0
    %178 = vmatpush1.msra.mxu0 %v146
    %179 = vmatprep.subr.mxu0 0.0
    %180 = vmatpush1.msra.mxu0 %v147
    %181 = vmatprep.subr.mxu0 0.0
    %182 = vmatpush1.msra.mxu0 %v148
    %183 = vmatprep.subr.mxu0 0.0
    %184 = vmatpush1.msra.mxu0 %v149
    %185 = vmatprep.subr.mxu0 0.0
    %186 = vmatpush1.msra.mxu0 %v150
    %187 = vmatprep.subr.mxu0 0.0
    %188 = vmatpush1.msra.mxu0 %v151
    %189 = vmatprep.subr.mxu0 0.0
    %190 = vmatpush1.msra.mxu0 %v152
    %191 = vmatprep.subr.mxu0 0.0
    %192 = vmatpush1.msra.mxu0 %v153
    %193 = vmatprep.subr.mxu0 0.0
    %194 = vmatpush1.msra.mxu0 %v154
    %195 = vmatprep.subr.mxu0 0.0
    %196 = vmatpush1.msra.mxu0 0.0
    %197 = vmatprep.subr.mxu0 0.0
    %198 = vmatpush1.msra.mxu0 0.0
    %199 = vmatprep.subr.mxu0 0.0
    %200 = vmatpush1.msra.mxu0 0.0
    %201 = vmatprep.subr.mxu0 0.0
    %202 = vmatpush1.msra.mxu0 0.0
    %203 = vmatprep.subr.mxu0 0.0
    %204 = vmatpush1.msra.mxu0 0.0
    %205 = vmatprep.subr.mxu0 0.0
    %206 = vmatpush1.msra.mxu0 0.0
    %207 = vmatprep.subr.mxu0 0.0
    %208 = vmatpush1.msra.mxu0 0.0
    %209 = vmatprep.subr.mxu0 0.0
    %210 = vmatpush1.msra.mxu0 0.0
    %211 = vmatprep.subr.mxu0 0.0
    %212 = vmatpush1.msra.mxu0 0.0
    %213 = vmatprep.subr.mxu0 0.0
    %214 = vmatpush1.msra.mxu0 0.0
    %215 = vmatprep.subr.mxu0 0.0
    %216 = vmatpush1.msra.mxu0 0.0
    %217 = vmatprep.subr.mxu0 0.0
    %218 = vmatpush1.msra.mxu0 0.0
    %219 = vmatprep.subr.mxu0 0.0
    %220 = vmatpush1.msra.mxu0 0.0
    %221 = vmatprep.subr.mxu0 0.0
    %222 = vmatpush1.msra.mxu0 0.0
    %223 = vmatprep.subr.mxu0 0.0
    %224 = vmatpush1.msra.mxu0 0.0
    %225 = vmatprep.subr.mxu0 0.0
    %226 = vmatpush1.msra.mxu0 0.0
    %227 = vmatprep.mubr.f32.mxu0 0.0
    %228 = vmatmul.mubr.f32.gmra.mrb[0].mxu0 %v137
    %v229 = vpop.f32.mrb[0].mxu0
    %v230 = vadd.f32 %v161, %v229
    %v231 = vpop.f32.mrb[0].mxu0
    %232 = vdwg.mxu0
    %vm233 = vcmp.ge.f32.partialorder %v230, 0.0
    %v234 = vmul.f32 %v230, 0.1
    %v235 = vsel %vm233, %v230, %v234
    %236 = vst [vmem:[#allocation7] sm:$0xf] %v235
    // Predicated region
    $region22: #{tpu_custom_call.1} parent=1 // pred_check
      _
    $region23: #{tpu_custom_call.1} parent=1 // pred_check_branch
      %238 = sbr.rel (0) target = $region25
    $region24: #{tpu_custom_call.1} parent=1 // pred_region
      %s240 = ssub.s32 64, 64
      %241 = vsyncadd [#allocation4], %s240
      %s243 = sshll.u32 [#allocation7], 4
      %s244 = int_to_ptr.vmem [resolvable:$true] %s243
      %246 = dma.vmem_to_hbm [thread:$0]  %s244, 64, %s3, [#allocation4]
    $region25: #{tpu_custom_call.1} parent=1 // pred_fallthru
      _
    // Predicated region
    $region26: #{tpu_custom_call.1} parent=1 // pred_check
      _
    $region27: #{tpu_custom_call.1} parent=1 // pred_check_branch
      %248 = sbr.rel (0) target = $region29
    $region28: #{tpu_custom_call.1} parent=1 // pred_region
      %249 = dma.done [#allocation4], 64
    $region29: #{tpu_custom_call.1} parent=1 // pred_fallthru
      _
    %250 = vsyncpa [#allocation3], 1
    %251 = vsyncpa [#allocation6], 1
    %252 = vsyncpa [#allocation4], 1

</llo_original>
